<compile_context>
chip_gen: v5e
topology: v5e:2x2
jax: 0.10.0
libtpu: 0.0.40
codegen_flags: <defaults>
</compile_context>

<pallas_src>
import jax
import jax.numpy as jnp
from jax.experimental import pallas as pl
from jax.experimental.pallas import tpu as pltpu

LANE = 128  # vreg lane width / MXU padding target for feature dims


def mlp_kernel(x_ref, w_ref, b_ref, o_ref):
    # x_ref: (tile_b, in_f)  f32   -- streamed per grid step (unpadded features)
    # w_ref: (L, LANE, LANE) bf16  -- resident (constant index_map), zero-padded
    # b_ref: (L, 1, LANE)    f32   -- resident, zero-padded
    # o_ref: (tile_b, out_f)       -- only the real output columns
    n_layers = w_ref.shape[0]
    in_f = x_ref.shape[1]
    out_f = o_ref.shape[1]

    # Layer 0: contract over only the real in_f rows of the padded weight.
    w0 = w_ref[0][:in_f, :]                                   # (in_f, LANE) bf16
    h = jnp.dot(x_ref[...].astype(jnp.bfloat16), w0,
                preferred_element_type=jnp.float32) + b_ref[0]
    h = jnp.maximum(h, 0.0)                                   # ReLU (f32 VPU)

    # Hidden layers (padded columns remain exactly zero through ReLU).
    for l in range(1, n_layers - 1):
        h = jnp.dot(h.astype(jnp.bfloat16), w_ref[l],
                    preferred_element_type=jnp.float32) + b_ref[l]
        h = jnp.maximum(h, 0.0)

    # Output layer: no ReLU; store only the real columns.
    y = jnp.dot(h.astype(jnp.bfloat16), w_ref[n_layers - 1],
                preferred_element_type=jnp.float32) + b_ref[n_layers - 1]
    o_ref[...] = y[:, :out_f].astype(o_ref.dtype)


def simple_mlp_forward(x, params, *, tile_b=2048):
    """x: (B, input_features) f32; params: list of (W_t, b) with W_t (in, out).

    Weights are cast to bf16 for storage / MXU; accumulation is f32.
    Returns (B, output_features) in x.dtype.
    """
    B, in_f = x.shape
    out_f = params[-1][0].shape[1]
    n_layers = len(params)

    # All feature dims (in, hidden, out) must fit one lane-padded tile.
    for w, _ in params:
        assert w.shape[0] <= LANE and w.shape[1] <= LANE, (
            f"feature dim > {LANE} not supported by this kernel: {w.shape}")
    assert in_f == params[0][0].shape[0]

    # --- pack & pad parameters (exactness preserved by zero padding) ---
    w_stack = jnp.stack([
        jnp.pad(w.astype(jnp.bfloat16),
                ((0, LANE - w.shape[0]), (0, LANE - w.shape[1])))
        for w, _ in params
    ])                                                        # (L, LANE, LANE) bf16
    b_stack = jnp.stack([
        jnp.pad(jnp.reshape(b, (1, -1)).astype(jnp.float32),
                ((0, 0), (0, LANE - b.shape[-1])))
        for _, b in params
    ])                                                        # (L, 1, LANE) f32

    # --- tile size: multiple of 8 sublanes; tiny batches -> single grid step.
    # (For v7x with large B, pick tile_b so the grid stays even and >= 2.)
    tile_b = max(8, min(int(tile_b), -(-B // 8) * 8))
    tile_b = -(-tile_b // 8) * 8
    grid = (pl.cdiv(B, tile_b),)

    out = pl.pallas_call(
        mlp_kernel,
        out_shape=jax.ShapeDtypeStruct((B, out_f), x.dtype),
        grid=grid,
        in_specs=[
            pl.BlockSpec((tile_b, in_f), lambda i: (i, 0)),              # x streams (no pad)
            pl.BlockSpec((n_layers, LANE, LANE), lambda i: (0, 0, 0)),   # weights resident
            pl.BlockSpec((n_layers, 1, LANE), lambda i: (0, 0, 0)),      # biases resident
        ],
        out_specs=pl.BlockSpec((tile_b, out_f), lambda i: (i, 0)),       # real cols only
        compiler_params=pltpu.CompilerParams(
            dimension_semantics=("parallel",)),               # shard batch across TCs (v7x)
    )(x, w_stack, b_stack)

    return out


def init_params(key, input_features, output_features, hidden_units):
    """Deterministic init mimicking nn.Linear (uniform +/- 1/sqrt(fan_in)).

    Weights are returned already transposed to (in_features, out_features)."""
    dims = [(input_features, hidden_units),
            (hidden_units, hidden_units),
            (hidden_units, hidden_units),
            (hidden_units, output_features)]
    params = []
    for (fan_in, fan_out) in dims:
        key, kw, kb = jax.random.split(key, 3)
        bound = 1.0 / jnp.sqrt(float(fan_in))
        w_t = jax.random.uniform(kw, (fan_in, fan_out), jnp.float32,
                                 minval=-bound, maxval=bound)
        b = jax.random.uniform(kb, (1, fan_out), jnp.float32,
                               minval=-bound, maxval=bound)
        params.append((w_t, b))
    return params


def reference_forward(x, params):
    """Mirrors the kernel arithmetic: bf16 weights + bf16 activations into the
    dot, f32 accumulation / bias / ReLU."""
    h = x
    for i, (w, b) in enumerate(params):
        h = jnp.dot(h.astype(jnp.bfloat16), w.astype(jnp.bfloat16),
                    preferred_element_type=jnp.float32) + b.astype(jnp.float32)
        if i < len(params) - 1:
            h = jnp.maximum(h, 0.0)
    return h


if __name__ == "__main__":
    input_features = 16
    output_features = 4
    hidden_units = 8
    batch = 64

    key = jax.random.PRNGKey(0)
    key, kx = jax.random.split(key)
    x = jax.random.normal(kx, (batch, input_features), jnp.float32)
    params = init_params(key, input_features, output_features, hidden_units)

    # Default tile_b clamps to one 64-row grid step here (grid=(1,)) -- the
    # right choice for a tiny batch on single-TC v5e/v6e.
    out = simple_mlp_forward(x, params)
    out = jax.block_until_ready(out)

    ref = reference_forward(x, params)

    assert out.shape == (batch, output_features)
    assert jnp.allclose(out, ref, atol=1e-3, rtol=1e-3), float(jnp.max(jnp.abs(out - ref)))

    print("KERNEL_OK")
</pallas_src>

<mosaic_0001>
module attributes {stable_mosaic.version = 11 : i64} {
  func.func @mlp_kernel(%arg0: i32, %arg1: memref<64x16xf32, #tpu.memory_space<vmem>>, %arg2: memref<4x128x128xbf16, #tpu.memory_space<vmem>>, %arg3: memref<4x1x128xf32, #tpu.memory_space<vmem>>, %arg4: memref<64x4xf32, #tpu.memory_space<vmem>>) attributes {dimension_semantics = [#tpu.dimension_semantics<parallel>], iteration_bounds = array<i64: 1>, scalar_prefetch = 0 : i64, scratch_operands = 0 : i64, tpu.core_type = #tpu.core_type<tc>, window_params = [{transform_indices = @transform_0, window_bounds = array<i64: 64, 16>}, {pipeline_mode = #tpu.pipeline_mode<synchronous>, transform_indices = @transform_1, window_bounds = array<i64: 4, 128, 128>}, {pipeline_mode = #tpu.pipeline_mode<synchronous>, transform_indices = @transform_2, window_bounds = array<i64: 4, 1, 128>}, {transform_indices = @transform_3, window_bounds = array<i64: 64, 4>}]} {
    %c0 = arith.constant 0 : index
    %c0_0 = arith.constant 0 : index
    %c0_1 = arith.constant 0 : index
    %0 = vector.load %arg2[%c0, %c0_0, %c0_1] : memref<4x128x128xbf16, #tpu.memory_space<vmem>>, vector<1x128x128xbf16>
    %1 = vector.shape_cast %0 : vector<1x128x128xbf16> to vector<128x128xbf16>
    %2 = vector.extract_strided_slice %1 {offsets = [0, 0], sizes = [16, 128], strides = [1, 1]} : vector<128x128xbf16> to vector<16x128xbf16>
    %c0_2 = arith.constant 0 : index
    %c0_3 = arith.constant 0 : index
    %3 = vector.load %arg1[%c0_2, %c0_3] : memref<64x16xf32, #tpu.memory_space<vmem>>, vector<64x16xf32>
    %4 = arith.truncf %3 : vector<64x16xf32> to vector<64x16xbf16>
    %cst = arith.constant dense<0.000000e+00> : vector<64x128xf32>
    %5 = tpu.matmul %4, %2, %cst {dimension_numbers = #tpu.dot_dimension_numbers<[1], [0], [0], [1], [0, 0, 1, 1], [], []>} : vector<64x16xbf16>, vector<16x128xbf16>, vector<64x128xf32> -> vector<64x128xf32>
    %c0_4 = arith.constant 0 : index
    %c0_5 = arith.constant 0 : index
    %c0_6 = arith.constant 0 : index
    %6 = vector.load %arg3[%c0_4, %c0_5, %c0_6] : memref<4x1x128xf32, #tpu.memory_space<vmem>>, vector<1x1x128xf32>
    %7 = vector.shape_cast %6 : vector<1x1x128xf32> to vector<1x128xf32>
    %8 = vector.broadcast %7 : vector<1x128xf32> to vector<64x128xf32>
    %9 = arith.addf %5, %8 : vector<64x128xf32>
    %cst_7 = arith.constant 0.000000e+00 : f32
    %10 = vector.broadcast %cst_7 : f32 to vector<64x128xf32>
    %11 = arith.maximumf %9, %10 : vector<64x128xf32>
    %12 = arith.truncf %11 : vector<64x128xf32> to vector<64x128xbf16>
    %c1 = arith.constant 1 : index
    %c0_8 = arith.constant 0 : index
    %c0_9 = arith.constant 0 : index
    %13 = vector.load %arg2[%c1, %c0_8, %c0_9] : memref<4x128x128xbf16, #tpu.memory_space<vmem>>, vector<1x128x128xbf16>
    %14 = vector.shape_cast %13 : vector<1x128x128xbf16> to vector<128x128xbf16>
    %cst_10 = arith.constant dense<0.000000e+00> : vector<64x128xf32>
    %15 = tpu.matmul %12, %14, %cst_10 {dimension_numbers = #tpu.dot_dimension_numbers<[1], [0], [0], [1], [0, 0, 1, 1], [], []>} : vector<64x128xbf16>, vector<128x128xbf16>, vector<64x128xf32> -> vector<64x128xf32>
    %c1_11 = arith.constant 1 : index
    %c0_12 = arith.constant 0 : index
    %c0_13 = arith.constant 0 : index
    %16 = vector.load %arg3[%c1_11, %c0_12, %c0_13] : memref<4x1x128xf32, #tpu.memory_space<vmem>>, vector<1x1x128xf32>
    %17 = vector.shape_cast %16 : vector<1x1x128xf32> to vector<1x128xf32>
    %18 = vector.broadcast %17 : vector<1x128xf32> to vector<64x128xf32>
    %19 = arith.addf %15, %18 : vector<64x128xf32>
    %cst_14 = arith.constant 0.000000e+00 : f32
    %20 = vector.broadcast %cst_14 : f32 to vector<64x128xf32>
    %21 = arith.maximumf %19, %20 : vector<64x128xf32>
    %22 = arith.truncf %21 : vector<64x128xf32> to vector<64x128xbf16>
    %c2 = arith.constant 2 : index
    %c0_15 = arith.constant 0 : index
    %c0_16 = arith.constant 0 : index
    %23 = vector.load %arg2[%c2, %c0_15, %c0_16] : memref<4x128x128xbf16, #tpu.memory_space<vmem>>, vector<1x128x128xbf16>
    %24 = vector.shape_cast %23 : vector<1x128x128xbf16> to vector<128x128xbf16>
    %cst_17 = arith.constant dense<0.000000e+00> : vector<64x128xf32>
    %25 = tpu.matmul %22, %24, %cst_17 {dimension_numbers = #tpu.dot_dimension_numbers<[1], [0], [0], [1], [0, 0, 1, 1], [], []>} : vector<64x128xbf16>, vector<128x128xbf16>, vector<64x128xf32> -> vector<64x128xf32>
    %c2_18 = arith.constant 2 : index
    %c0_19 = arith.constant 0 : index
    %c0_20 = arith.constant 0 : index
    %26 = vector.load %arg3[%c2_18, %c0_19, %c0_20] : memref<4x1x128xf32, #tpu.memory_space<vmem>>, vector<1x1x128xf32>
    %27 = vector.shape_cast %26 : vector<1x1x128xf32> to vector<1x128xf32>
    %28 = vector.broadcast %27 : vector<1x128xf32> to vector<64x128xf32>
    %29 = arith.addf %25, %28 : vector<64x128xf32>
    %cst_21 = arith.constant 0.000000e+00 : f32
    %30 = vector.broadcast %cst_21 : f32 to vector<64x128xf32>
    %31 = arith.maximumf %29, %30 : vector<64x128xf32>
    %32 = arith.truncf %31 : vector<64x128xf32> to vector<64x128xbf16>
    %c3 = arith.constant 3 : index
    %c0_22 = arith.constant 0 : index
    %c0_23 = arith.constant 0 : index
    %33 = vector.load %arg2[%c3, %c0_22, %c0_23] : memref<4x128x128xbf16, #tpu.memory_space<vmem>>, vector<1x128x128xbf16>
    %34 = vector.shape_cast %33 : vector<1x128x128xbf16> to vector<128x128xbf16>
    %cst_24 = arith.constant dense<0.000000e+00> : vector<64x128xf32>
    %35 = tpu.matmul %32, %34, %cst_24 {dimension_numbers = #tpu.dot_dimension_numbers<[1], [0], [0], [1], [0, 0, 1, 1], [], []>} : vector<64x128xbf16>, vector<128x128xbf16>, vector<64x128xf32> -> vector<64x128xf32>
    %c3_25 = arith.constant 3 : index
    %c0_26 = arith.constant 0 : index
    %c0_27 = arith.constant 0 : index
    %36 = vector.load %arg3[%c3_25, %c0_26, %c0_27] : memref<4x1x128xf32, #tpu.memory_space<vmem>>, vector<1x1x128xf32>
    %37 = vector.shape_cast %36 : vector<1x1x128xf32> to vector<1x128xf32>
    %38 = vector.broadcast %37 : vector<1x128xf32> to vector<64x128xf32>
    %39 = arith.addf %35, %38 : vector<64x128xf32>
    %40 = vector.extract_strided_slice %39 {offsets = [0, 0], sizes = [64, 4], strides = [1, 1]} : vector<64x128xf32> to vector<64x4xf32>
    %c0_28 = arith.constant 0 : index
    %c0_29 = arith.constant 0 : index
    %41 = vector.load %arg4[%c0_28, %c0_29] : memref<64x4xf32, #tpu.memory_space<vmem>>, vector<64x4xf32>
    tpu.vector_store %arg4[%c0_28, %c0_29], %40 {strides = array<i32>} : memref<64x4xf32, #tpu.memory_space<vmem>>, vector<64x4xf32>,
    return
  }
  func.func @transform_0(%arg0: i32) -> (i32, i32) {
    %c0_i32 = arith.constant 0 : i32
    %c0_i32_0 = arith.constant 0 : i32
    return %arg0, %c0_i32 : i32, i32
  }
  func.func @transform_1(%arg0: i32) -> (i32, i32, i32) {
    %c0_i32 = arith.constant 0 : i32
    %c0_i32_0 = arith.constant 0 : i32
    %c0_i32_1 = arith.constant 0 : i32
    %c0_i32_2 = arith.constant 0 : i32
    return %c0_i32, %c0_i32_0, %c0_i32_1 : i32, i32, i32
  }
  func.func @transform_2(%arg0: i32) -> (i32, i32, i32) {
    %c0_i32 = arith.constant 0 : i32
    %c0_i32_0 = arith.constant 0 : i32
    %c0_i32_1 = arith.constant 0 : i32
    %c0_i32_2 = arith.constant 0 : i32
    return %c0_i32, %c0_i32_0, %c0_i32_1 : i32, i32, i32
  }
  func.func @transform_3(%arg0: i32) -> (i32, i32) {
    %c0_i32 = arith.constant 0 : i32
    %c0_i32_0 = arith.constant 0 : i32
    return %arg0, %c0_i32 : i32, i32
  }
}

</mosaic_0001>

<llo_original>
// kernel: tpu_custom_call.1
$region0: #{tpu_custom_call.1}
  #allocation0 [shape = 'u32[]', space=smem, size = 0x4, offset = 0x4, fixed_abs, tag = 'smem constant byte address 0x4 - core index']
  #allocation1 [shape = 'u32[72,128]{1,0:T(1,128)}', space=vmem, size = 0x9000, scoped, tag = 'internal scratch']
  %s0 = inlined_call_operand.vmem [shape: f32[64,16], index: 0, kind: input, shape index: {}]
  %s1 = inlined_call_operand.hbm [shape: bf16[4,128,128], index: 1, kind: input, shape index: {}]
  %s2 = inlined_call_operand.vmem [shape: f32[4,1,128], index: 2, kind: input, shape index: {}]
  %s3 = inlined_call_operand.vmem [shape: f32[64,4], index: 3, kind: output, shape index: {}]
  %s4 = sld [smem:[#allocation0]]
  $region26: #{tpu_custom_call.1} parent=0
    _
  %s6 = ssub.s32 1, %s4
  %s7 = scalar_select 0, %s6, %s4
  $region1: #{tpu_custom_call.1} parent=0
    #allocation2 [shape = 'u8[131072]{0}', space=vmem, size = 0x20000, scoped, tag = 'input window, operand 1, single buffered']
    #allocation3 [shape = 's32[1]{0}', space=sflag, size = 0x4, scoped, tag = 'scoped memory for tpu_custom_call.1']
    %8 = vsyncpa [#allocation3], 0
    // Predicated region
    $region2: #{tpu_custom_call.1} parent=1 // pred_check
      _
    $region3: #{tpu_custom_call.1} parent=1 // pred_check_branch
      %10 = sbr.rel (0) target = $region5
    $region4: #{tpu_custom_call.1} parent=1 // pred_region
      _
    $region5: #{tpu_custom_call.1} parent=1 // pred_fallthru
      _
    // Predicated region
    $region6: #{tpu_custom_call.1} parent=1 // pred_check
      _
    $region7: #{tpu_custom_call.1} parent=1 // pred_check_branch
      %12 = sbr.rel (0) target = $region9
    $region8: #{tpu_custom_call.1} parent=1 // pred_region
      %14 = vsyncadd [#allocation3], 0
      %s15 = sshll.u32 %s1, 4
      %s16 = int_to_ptr.hbm [resolvable:$true] %s15
      %s17 = sshll.u32 [#allocation2], 4
      %s18 = int_to_ptr.vmem [resolvable:$true] %s17
      %23 = dma.hbm_to_vmem [thread:$0]  %s16, 4096, %s18, [#allocation3], 64, 64, 4
    $region9: #{tpu_custom_call.1} parent=1 // pred_fallthru
      _
    // Predicated region
    $region10: #{tpu_custom_call.1} parent=1 // pred_check
      _
    $region11: #{tpu_custom_call.1} parent=1 // pred_check_branch
      %25 = sbr.rel (0) target = $region13
    $region12: #{tpu_custom_call.1} parent=1 // pred_region
      _
    $region13: #{tpu_custom_call.1} parent=1 // pred_fallthru
      _
    // Predicated region
    $region14: #{tpu_custom_call.1} parent=1 // pred_check
      _
    $region15: #{tpu_custom_call.1} parent=1 // pred_check_branch
      %27 = sbr.rel (0) target = $region17
    $region16: #{tpu_custom_call.1} parent=1 // pred_region
      %29 = dma.done [#allocation3], 4096
    $region17: #{tpu_custom_call.1} parent=1 // pred_fallthru
      _
    %v31 = vld [vmem:[#allocation2] sm:$0xf]
    %v32 = vld [vmem:[#allocation2 + $0x4] sm:$0xf]
    %v33 = vld [vmem:[%s0] sm:$0xff]
    %v34 = vld [vmem:[%s0 + $0x8] sm:$0xff]
    %v35 = vld [vmem:[%s0 + $0x10] sm:$0xff]
    %v36 = vld [vmem:[%s0 + $0x18] sm:$0xff]
    %v37 = vld [vmem:[%s0 + $0x20] sm:$0xff]
    %v38 = vld [vmem:[%s0 + $0x28] sm:$0xff]
    %v39 = vld [vmem:[%s0 + $0x30] sm:$0xff]
    %v40 = vld [vmem:[%s0 + $0x38] sm:$0xff]
    %v41 = vpack.c.bf16 %v34, %v33
    %v42 = vpack.c.bf16 %v36, %v35
    %v43 = vpack.c.bf16 %v38, %v37
    %v44 = vpack.c.bf16 %v40, %v39
    %v45 = vld [vmem:[%s2] sm:$0x1]
    %v47 = vperm.slane %v45, 0
    %v51 = vunpack.c.l.b16 %v31
    %v52 = vunpack.c.l.b16 %v32
    %v53 = vpack.c.b16 %v52, %v51
    %vm55 = vcmask 130048
    %v57 = vsel %vm55, %v41, 0
    %v60 = vsel %vm55, %v42, 0
    %v63 = vsel %vm55, %v43, 0
    %v66 = vsel %vm55, %v44, 0
    %68 = vmatpush.bf16.msra.mxu0 0
    %69 = vmatpush.bf16.msra.mxu0 0
    %70 = vmatpush.bf16.msra.mxu0 0
    %71 = vmatpush.bf16.msra.mxu0 0
    %72 = vmatpush.bf16.msra.mxu0 0
    %73 = vmatpush.bf16.msra.mxu0 0
    %74 = vmatpush.bf16.msra.mxu0 0
    %75 = vmatpush.bf16.msra.mxu0 %v53
    %76 = vmatmul.bf16.gmra.mxu0 %v57
    %v77 = vpop.f32.mrf.mxu0
    %v78 = vadd.f32 %v47, %v77
    %v79 = vpop.f32.mrf.mxu0
    %v80 = vadd.f32 %v47, %v79
    %81 = vmatmul.bf16.gmra.mxu0 %v60
    %v82 = vpop.f32.mrf.mxu0
    %v83 = vadd.f32 %v47, %v82
    %v84 = vpop.f32.mrf.mxu0
    %v85 = vadd.f32 %v47, %v84
    %86 = vmatmul.bf16.gmra.mxu0 %v63
    %v87 = vpop.f32.mrf.mxu0
    %v88 = vadd.f32 %v47, %v87
    %v89 = vpop.f32.mrf.mxu0
    %v90 = vadd.f32 %v47, %v89
    %91 = vmatmul.bf16.gmra.mxu0 %v66
    %v92 = vpop.f32.mrf.mxu0
    %v93 = vadd.f32 %v47, %v92
    %v94 = vpop.f32.mrf.mxu0
    %v95 = vadd.f32 %v47, %v94
    %96 = vdwg.mxu0
    %v97 = vmax.f32 %v78, 0.0
    %v98 = vmax.f32 %v80, 0.0
    %v99 = vmax.f32 %v83, 0.0
    %v100 = vmax.f32 %v85, 0.0
    %v101 = vmax.f32 %v88, 0.0
    %v102 = vmax.f32 %v90, 0.0
    %v103 = vmax.f32 %v93, 0.0
    %v104 = vmax.f32 %v95, 0.0
    %v105 = vpack.c.bf16 %v98, %v97
    %v106 = vpack.c.bf16 %v100, %v99
    %v107 = vpack.c.bf16 %v102, %v101
    %v108 = vpack.c.bf16 %v104, %v103
    %s109 = scalar_lea.vmem [#allocation2], 64
    %v110 = vld [vmem:[%s109] sm:$0xf]
    %v111 = vld [vmem:[%s109 + $0x4] sm:$0xf]
    %v112 = vld [vmem:[%s109 + $0x8] sm:$0xf]
    %v113 = vld [vmem:[%s109 + $0xc] sm:$0xf]
    %v114 = vld [vmem:[%s109 + $0x10] sm:$0xf]
    %v115 = vld [vmem:[%s109 + $0x14] sm:$0xf]
    %v116 = vld [vmem:[%s109 + $0x18] sm:$0xf]
    %v117 = vld [vmem:[%s109 + $0x1c] sm:$0xf]
    %v118 = vld [vmem:[%s109 + $0x20] sm:$0xf]
    %v119 = vld [vmem:[%s109 + $0x24] sm:$0xf]
    %v120 = vld [vmem:[%s109 + $0x28] sm:$0xf]
    %v121 = vld [vmem:[%s109 + $0x2c] sm:$0xf]
    %v122 = vld [vmem:[%s109 + $0x30] sm:$0xf]
    %v123 = vld [vmem:[%s109 + $0x34] sm:$0xf]
    %v124 = vld [vmem:[%s109 + $0x38] sm:$0xf]
    %v125 = vld [vmem:[%s109 + $0x3c] sm:$0xf]
    %s126 = scalar_lea.vmem %s2, 1
    %v127 = vld [vmem:[%s126] sm:$0x1]
    %v129 = vperm.slane %v127, 0
    %v147 = vunpack.c.l.b16 %v110
    %v148 = vunpack.c.l.b16 %v111
    %v149 = vunpack.c.l.b16 %v112
    %v150 = vunpack.c.l.b16 %v113
    %v151 = vunpack.c.l.b16 %v114
    %v152 = vunpack.c.l.b16 %v115
    %v153 = vunpack.c.l.b16 %v116
    %v154 = vunpack.c.l.b16 %v117
    %v155 = vunpack.c.l.b16 %v118
    %v156 = vunpack.c.l.b16 %v119
    %v157 = vunpack.c.l.b16 %v120
    %v158 = vunpack.c.l.b16 %v121
    %v159 = vunpack.c.l.b16 %v122
    %v160 = vunpack.c.l.b16 %v123
    %v161 = vunpack.c.l.b16 %v124
    %v162 = vunpack.c.l.b16 %v125
    %v163 = vpack.c.b16 %v148, %v147
    %v164 = vpack.c.b16 %v150, %v149
    %v165 = vpack.c.b16 %v152, %v151
    %v166 = vpack.c.b16 %v154, %v153
    %v167 = vpack.c.b16 %v156, %v155
    %v168 = vpack.c.b16 %v158, %v157
    %v169 = vpack.c.b16 %v160, %v159
    %v170 = vpack.c.b16 %v162, %v161
    %179 = vmatpush.bf16.msra.mxu0 %v170
    %180 = vmatpush.bf16.msra.mxu0 %v169
    %181 = vmatpush.bf16.msra.mxu0 %v168
    %182 = vmatpush.bf16.msra.mxu0 %v167
    %183 = vmatpush.bf16.msra.mxu0 %v166
    %184 = vmatpush.bf16.msra.mxu0 %v165
    %185 = vmatpush.bf16.msra.mxu0 %v164
    %186 = vmatpush.bf16.msra.mxu0 %v163
    %187 = vmatmul.bf16.gmra.mxu0 %v105
    %v188 = vpop.f32.mrf.mxu0
    %v189 = vadd.f32 %v129, %v188
    %v190 = vpop.f32.mrf.mxu0
    %v191 = vadd.f32 %v129, %v190
    %192 = vmatmul.bf16.gmra.mxu0 %v106
    %v193 = vpop.f32.mrf.mxu0
    %v194 = vadd.f32 %v129, %v193
    %v195 = vpop.f32.mrf.mxu0
    %v196 = vadd.f32 %v129, %v195
    %197 = vmatmul.bf16.gmra.mxu0 %v107
    %v198 = vpop.f32.mrf.mxu0
    %v199 = vadd.f32 %v129, %v198
    %v200 = vpop.f32.mrf.mxu0
    %v201 = vadd.f32 %v129, %v200
    %202 = vmatmul.bf16.gmra.mxu0 %v108
    %v203 = vpop.f32.mrf.mxu0
    %v204 = vadd.f32 %v129, %v203
    %v205 = vpop.f32.mrf.mxu0
    %v206 = vadd.f32 %v129, %v205
    %207 = vdwg.mxu0
    %v208 = vmax.f32 %v189, 0.0
    %v209 = vmax.f32 %v191, 0.0
    %v210 = vmax.f32 %v194, 0.0
    %v211 = vmax.f32 %v196, 0.0
    %v212 = vmax.f32 %v199, 0.0
    %v213 = vmax.f32 %v201, 0.0
    %v214 = vmax.f32 %v204, 0.0
    %v215 = vmax.f32 %v206, 0.0
    %v216 = vpack.c.bf16 %v209, %v208
    %v217 = vpack.c.bf16 %v211, %v210
    %v218 = vpack.c.bf16 %v213, %v212
    %v219 = vpack.c.bf16 %v215, %v214
    %s220 = scalar_lea.vmem [#allocation2], 128
    %v221 = vld [vmem:[%s220] sm:$0xf]
    %v222 = vld [vmem:[%s220 + $0x4] sm:$0xf]
    %v223 = vld [vmem:[%s220 + $0x8] sm:$0xf]
    %v224 = vld [vmem:[%s220 + $0xc] sm:$0xf]
    %v225 = vld [vmem:[%s220 + $0x10] sm:$0xf]
    %v226 = vld [vmem:[%s220 + $0x14] sm:$0xf]
    %v227 = vld [vmem:[%s220 + $0x18] sm:$0xf]
    %v228 = vld [vmem:[%s220 + $0x1c] sm:$0xf]
    %v229 = vld [vmem:[%s220 + $0x20] sm:$0xf]
    %v230 = vld [vmem:[%s220 + $0x24] sm:$0xf]
    %v231 = vld [vmem:[%s220 + $0x28] sm:$0xf]
    %v232 = vld [vmem:[%s220 + $0x2c] sm:$0xf]
    %v233 = vld [vmem:[%s220 + $0x30] sm:$0xf]
    %v234 = vld [vmem:[%s220 + $0x34] sm:$0xf]
    %v235 = vld [vmem:[%s220 + $0x38] sm:$0xf]
    %v236 = vld [vmem:[%s220 + $0x3c] sm:$0xf]
    %s237 = scalar_lea.vmem %s2, 2
    %v238 = vld [vmem:[%s237] sm:$0x1]
    %v240 = vperm.slane %v238, 0
    %v258 = vunpack.c.l.b16 %v221
    %v259 = vunpack.c.l.b16 %v222
    %v260 = vunpack.c.l.b16 %v223
    %v261 = vunpack.c.l.b16 %v224
    %v262 = vunpack.c.l.b16 %v225
    %v263 = vunpack.c.l.b16 %v226
    %v264 = vunpack.c.l.b16 %v227
    %v265 = vunpack.c.l.b16 %v228
    %v266 = vunpack.c.l.b16 %v229
    %v267 = vunpack.c.l.b16 %v230
    %v268 = vunpack.c.l.b16 %v231
    %v269 = vunpack.c.l.b16 %v232
    %v270 = vunpack.c.l.b16 %v233
    %v271 = vunpack.c.l.b16 %v234
    %v272 = vunpack.c.l.b16 %v235
    %v273 = vunpack.c.l.b16 %v236
    %v274 = vpack.c.b16 %v259, %v258
    %v275 = vpack.c.b16 %v261, %v260
    %v276 = vpack.c.b16 %v263, %v262
    %v277 = vpack.c.b16 %v265, %v264
    %v278 = vpack.c.b16 %v267, %v266
    %v279 = vpack.c.b16 %v269, %v268
    %v280 = vpack.c.b16 %v271, %v270
    %v281 = vpack.c.b16 %v273, %v272
    %290 = vmatpush.bf16.msra.mxu0 %v281
    %291 = vmatpush.bf16.msra.mxu0 %v280
    %292 = vmatpush.bf16.msra.mxu0 %v279
    %293 = vmatpush.bf16.msra.mxu0 %v278
    %294 = vmatpush.bf16.msra.mxu0 %v277
    %295 = vmatpush.bf16.msra.mxu0 %v276
    %296 = vmatpush.bf16.msra.mxu0 %v275
    %297 = vmatpush.bf16.msra.mxu0 %v274
    %298 = vmatmul.bf16.gmra.mxu0 %v216
    %v299 = vpop.f32.mrf.mxu0
    %v300 = vadd.f32 %v240, %v299
    %v301 = vpop.f32.mrf.mxu0
    %v302 = vadd.f32 %v240, %v301
    %303 = vmatmul.bf16.gmra.mxu0 %v217
    %v304 = vpop.f32.mrf.mxu0
    %v305 = vadd.f32 %v240, %v304
    %v306 = vpop.f32.mrf.mxu0
    %v307 = vadd.f32 %v240, %v306
    %308 = vmatmul.bf16.gmra.mxu0 %v218
    %v309 = vpop.f32.mrf.mxu0
    %v310 = vadd.f32 %v240, %v309
    %v311 = vpop.f32.mrf.mxu0
    %v312 = vadd.f32 %v240, %v311
    %313 = vmatmul.bf16.gmra.mxu0 %v219
    %v314 = vpop.f32.mrf.mxu0
    %v315 = vadd.f32 %v240, %v314
    %v316 = vpop.f32.mrf.mxu0
    %v317 = vadd.f32 %v240, %v316
    %318 = vdwg.mxu0
    %v319 = vmax.f32 %v300, 0.0
    %v320 = vmax.f32 %v302, 0.0
    %v321 = vmax.f32 %v305, 0.0
    %v322 = vmax.f32 %v307, 0.0
    %v323 = vmax.f32 %v310, 0.0
    %v324 = vmax.f32 %v312, 0.0
    %v325 = vmax.f32 %v315, 0.0
    %v326 = vmax.f32 %v317, 0.0
    %v327 = vpack.c.bf16 %v320, %v319
    %v328 = vpack.c.bf16 %v322, %v321
    %v329 = vpack.c.bf16 %v324, %v323
    %v330 = vpack.c.bf16 %v326, %v325
    %s331 = scalar_lea.vmem [#allocation2], 192
    %v332 = vld [vmem:[%s331] sm:$0xf]
    %v333 = vld [vmem:[%s331 + $0x4] sm:$0xf]
    %v334 = vld [vmem:[%s331 + $0x8] sm:$0xf]
    %v335 = vld [vmem:[%s331 + $0xc] sm:$0xf]
    %v336 = vld [vmem:[%s331 + $0x10] sm:$0xf]
    %v337 = vld [vmem:[%s331 + $0x14] sm:$0xf]
    %v338 = vld [vmem:[%s331 + $0x18] sm:$0xf]
    %v339 = vld [vmem:[%s331 + $0x1c] sm:$0xf]
    %v340 = vld [vmem:[%s331 + $0x20] sm:$0xf]
    %v341 = vld [vmem:[%s331 + $0x24] sm:$0xf]
    %v342 = vld [vmem:[%s331 + $0x28] sm:$0xf]
    %v343 = vld [vmem:[%s331 + $0x2c] sm:$0xf]
    %v344 = vld [vmem:[%s331 + $0x30] sm:$0xf]
    %v345 = vld [vmem:[%s331 + $0x34] sm:$0xf]
    %v346 = vld [vmem:[%s331 + $0x38] sm:$0xf]
    %v347 = vld [vmem:[%s331 + $0x3c] sm:$0xf]
    %s348 = scalar_lea.vmem %s2, 3
    %v349 = vld [vmem:[%s348] sm:$0x1]
    %v351 = vperm.slane %v349, 0
    %v369 = vunpack.c.l.b16 %v332
    %v370 = vunpack.c.l.b16 %v333
    %v371 = vunpack.c.l.b16 %v334
    %v372 = vunpack.c.l.b16 %v335
    %v373 = vunpack.c.l.b16 %v336
    %v374 = vunpack.c.l.b16 %v337
    %v375 = vunpack.c.l.b16 %v338
    %v376 = vunpack.c.l.b16 %v339
    %v377 = vunpack.c.l.b16 %v340
    %v378 = vunpack.c.l.b16 %v341
    %v379 = vunpack.c.l.b16 %v342
    %v380 = vunpack.c.l.b16 %v343
    %v381 = vunpack.c.l.b16 %v344
    %v382 = vunpack.c.l.b16 %v345
    %v383 = vunpack.c.l.b16 %v346
    %v384 = vunpack.c.l.b16 %v347
    %v385 = vpack.c.b16 %v370, %v369
    %v386 = vpack.c.b16 %v372, %v371
    %v387 = vpack.c.b16 %v374, %v373
    %v388 = vpack.c.b16 %v376, %v375
    %v389 = vpack.c.b16 %v378, %v377
    %v390 = vpack.c.b16 %v380, %v379
    %v391 = vpack.c.b16 %v382, %v381
    %v392 = vpack.c.b16 %v384, %v383
    %401 = vmatpush.bf16.msra.mxu0 %v392
    %402 = vmatpush.bf16.msra.mxu0 %v391
    %403 = vmatpush.bf16.msra.mxu0 %v390
    %404 = vmatpush.bf16.msra.mxu0 %v389
    %405 = vmatpush.bf16.msra.mxu0 %v388
    %406 = vmatpush.bf16.msra.mxu0 %v387
    %407 = vmatpush.bf16.msra.mxu0 %v386
    %408 = vmatpush.bf16.msra.mxu0 %v385
    %409 = vmatmul.bf16.gmra.mxu0 %v327
    %v410 = vpop.f32.mrf.mxu0
    %v411 = vadd.f32 %v351, %v410
    %v412 = vpop.f32.mrf.mxu0
    %v413 = vadd.f32 %v351, %v412
    %414 = vmatmul.bf16.gmra.mxu0 %v328
    %v415 = vpop.f32.mrf.mxu0
    %v416 = vadd.f32 %v351, %v415
    %v417 = vpop.f32.mrf.mxu0
    %v418 = vadd.f32 %v351, %v417
    %419 = vmatmul.bf16.gmra.mxu0 %v329
    %v420 = vpop.f32.mrf.mxu0
    %v421 = vadd.f32 %v351, %v420
    %v422 = vpop.f32.mrf.mxu0
    %v423 = vadd.f32 %v351, %v422
    %424 = vmatmul.bf16.gmra.mxu0 %v330
    %v425 = vpop.f32.mrf.mxu0
    %v426 = vadd.f32 %v351, %v425
    %v427 = vpop.f32.mrf.mxu0
    %v428 = vadd.f32 %v351, %v427
    %429 = vdwg.mxu0
    %vm430 = vcmask 31744
    %431 = vst.msk [vmem:[%s3] sm:$0xff] %vm430, %v411
    %432 = vst.msk [vmem:[%s3 + $0x8] sm:$0xff] %vm430, %v413
    %433 = vst.msk [vmem:[%s3 + $0x10] sm:$0xff] %vm430, %v416
    %434 = vst.msk [vmem:[%s3 + $0x18] sm:$0xff] %vm430, %v418
    %435 = vst.msk [vmem:[%s3 + $0x20] sm:$0xff] %vm430, %v421
    %436 = vst.msk [vmem:[%s3 + $0x28] sm:$0xff] %vm430, %v423
    %437 = vst.msk [vmem:[%s3 + $0x30] sm:$0xff] %vm430, %v426
    %438 = vst.msk [vmem:[%s3 + $0x38] sm:$0xff] %vm430, %v428
    // Predicated region
    $region18: #{tpu_custom_call.1} parent=1 // pred_check
      _
    $region19: #{tpu_custom_call.1} parent=1 // pred_check_branch
      %440 = sbr.rel (0) target = $region21
    $region20: #{tpu_custom_call.1} parent=1 // pred_region
      _
    $region21: #{tpu_custom_call.1} parent=1 // pred_fallthru
      _
    // Predicated region
    $region22: #{tpu_custom_call.1} parent=1 // pred_check
      _
    $region23: #{tpu_custom_call.1} parent=1 // pred_check_branch
      %442 = sbr.rel (0) target = $region25
    $region24: #{tpu_custom_call.1} parent=1 // pred_region
      _
    $region25: #{tpu_custom_call.1} parent=1 // pred_fallthru
      _
    %443 = vsyncpa [#allocation3], 1

</llo_original>
